<compile_context>
chip_gen: v7x
topology: tpu7x:2x2x1
jax: 0.10.0
libtpu: 0.0.40
codegen_flags: <defaults>
</compile_context>

<pallas_src>
import functools

import jax
import jax.numpy as jnp
from jax.experimental import pallas as pl
from jax.experimental.pallas import tpu as pltpu

C_IN = 3       # image channels into the (stand-in) encoder
C_LAT = 23     # latent channels (decoder is nn.Conv2d(23, 3, kernel_size=1))
C_OUT = 3      # reconstruction channels


def _ae_kernel(x_ref, we_ref, be_ref, wd_ref, bd_ref, o_ref, *, nb):
    """One grid step: `nb` images x `tm` pixels.

    x_ref: (nb, C_IN, tm) f32 -- channels on sublanes, pixels lane-dense.
    Weights are tiny and stay resident in VMEM across the grid; MXU operands
    are bf16 with f32 accumulation.  o_ref: (nb, C_OUT, tm) f32.
    """
    we = we_ref[...]          # (C_LAT, C_IN)  bf16
    wd = wd_ref[...]          # (C_OUT, C_LAT) bf16
    be = be_ref[...]          # (C_LAT, 1)     f32
    bd = bd_ref[...]          # (C_OUT, 1)     f32
    for n in range(nb):       # nb is small and static (<= 8): unrolled
        x = x_ref[n].astype(jnp.bfloat16)                           # (C_IN, tm)
        # encoder 1x1 conv (+bias) + ReLU: (C_LAT, C_IN) @ (C_IN, tm)
        h = jnp.dot(we, x, preferred_element_type=jnp.float32) + be
        h = jnp.maximum(h, 0.0).astype(jnp.bfloat16)                # (C_LAT, tm)
        # decoder 1x1 conv (+bias): (C_OUT, C_LAT) @ (C_LAT, tm)
        y = jnp.dot(wd, h, preferred_element_type=jnp.float32) + bd
        o_ref[n] = y.astype(o_ref.dtype)                            # (C_OUT, tm)


@functools.partial(jax.jit, static_argnames=("max_tile",))
def autoencoder_forward(x_nchw, w_enc, b_enc, w_dec, b_dec, *, max_tile=32768):
    """x_nchw: (N, C_IN, H, W) f32.  Weights in PyTorch conv layout:
    w_enc (C_LAT, C_IN), b_enc (C_LAT,), w_dec (C_OUT, C_LAT), b_dec (C_OUT,).
    Returns (N, C_OUT, H, W) f32."""
    N, C, H, W = x_nchw.shape
    assert C == C_IN
    HW = H * W
    assert max_tile % 256 == 0

    # ---- tile selection ----------------------------------------------------
    # Large pixel tiles amortize the ~0.35 us per-grid-step overhead (~0.75
    # MiB/step of f32 I/O at 32K lanes).  Generation tuning: ~16K lanes is
    # enough on v5e, 32-64K on v6e, 64-128K on v7x (footprint ~ 40*tm bytes of
    # f32 I/O buffers + ~140*tm bytes of f32/bf16 temps, far below VMEM).
    if HW >= max_tile:
        tm, nb = max_tile, 1                       # tm is a multiple of 128
    else:
        tm = HW                                    # full-dim block: no 128 constraint
        nb = min(N, max(1, max_tile // max(HW, 1)), 8)   # batch small images

    nbb = -(-N // nb)           # batch blocks (last one may be ragged: masked)
    npb = -(-HW // tm)          # pixel blocks (last one may be ragged: masked)

    # v7x megacore balance: avoid a single-step grid when the pixel axis splits.
    if nbb * npb == 1 and tm % 256 == 0:
        tm //= 2
        npb = 2

    # ---- operand prep (no pads, no copies) ----------------------------------
    x3 = x_nchw.reshape(N, C_IN, HW)               # trailing-dim merge: no copy
    we = w_enc.astype(jnp.bfloat16)                # bf16 MXU operands
    wd = w_dec.astype(jnp.bfloat16)
    be = b_enc.reshape(C_LAT, 1).astype(jnp.float32)   # column -> lane broadcast
    bd = b_dec.reshape(C_OUT, 1).astype(jnp.float32)

    out = pl.pallas_call(
        functools.partial(_ae_kernel, nb=nb),
        out_shape=jax.ShapeDtypeStruct((N, C_OUT, HW), jnp.float32),
        grid_spec=pltpu.PrefetchScalarGridSpec(
            num_scalar_prefetch=0,
            grid=(nbb, npb),
            in_specs=[
                pl.BlockSpec((nb, C_IN, tm), lambda b, i: (b, 0, i)),   # pixels tile
                pl.BlockSpec((C_LAT, C_IN), lambda b, i: (0, 0)),       # enc weight (resident)
                pl.BlockSpec((C_LAT, 1), lambda b, i: (0, 0)),          # enc bias
                pl.BlockSpec((C_OUT, C_LAT), lambda b, i: (0, 0)),      # dec weight (resident)
                pl.BlockSpec((C_OUT, 1), lambda b, i: (0, 0)),          # dec bias
            ],
            out_specs=pl.BlockSpec((nb, C_OUT, tm), lambda b, i: (b, 0, i)),
        ),
        compiler_params=pltpu.CompilerParams(
            dimension_semantics=("parallel", "parallel"),
            vmem_limit_bytes=48 * 1024 * 1024,     # <= ~48 MiB headroom on v7x
        ),
    )(x3, we, be, wd, bd)

    return out.reshape(N, C_OUT, H, W)             # trailing-dim split: no copy


def _reference_forward(x_nchw, w_enc, b_enc, w_dec, b_dec, *, bf16_operands):
    # Pure-JAX reference of the same math (1x1 convs as channel matmuls), NCHW.
    cast = (lambda a: a.astype(jnp.bfloat16)) if bf16_operands else (lambda a: a)
    h = jnp.einsum("oi,nihw->nohw", cast(w_enc), cast(x_nchw),
                   preferred_element_type=jnp.float32) + b_enc[None, :, None, None]
    h = jnp.maximum(h, 0.0)
    y = jnp.einsum("oi,nihw->nohw", cast(w_dec), cast(h),
                   preferred_element_type=jnp.float32) + b_dec[None, :, None, None]
    return y


if __name__ == "__main__":
    key = jax.random.PRNGKey(0)
    k_x, k_we, k_be, k_wd, k_bd = jax.random.split(key, 5)

    # Small shapes consistent with the module (decoder expects a 23-ch latent).
    N, H, W = 2, 16, 16
    x = jax.random.normal(k_x, (N, C_IN, H, W), jnp.float32)

    # Deterministic parameter init (uniform, PyTorch-conv-ish fan-in scale),
    # weights stored in PyTorch layout (C_out, C_in).
    bound_e = 1.0 / (C_IN ** 0.5)
    w_enc = jax.random.uniform(k_we, (C_LAT, C_IN), jnp.float32, -bound_e, bound_e)
    b_enc = jax.random.uniform(k_be, (C_LAT,), jnp.float32, -bound_e, bound_e)
    bound_d = 1.0 / (C_LAT ** 0.5)
    w_dec = jax.random.uniform(k_wd, (C_OUT, C_LAT), jnp.float32, -bound_d, bound_d)
    b_dec = jax.random.uniform(k_bd, (C_OUT,), jnp.float32, -bound_d, bound_d)

    # TODO(synk): the real `encoder` is an external module passed to __init__;
    # a deterministic Conv2d(3, 23, 1) + ReLU stand-in is used here.

    out = autoencoder_forward(x, w_enc, b_enc, w_dec, b_dec)
    out = jax.block_until_ready(out)
    assert out.shape == (N, C_OUT, H, W)

    # Tight check against a reference doing the same bf16-operand / f32-accum
    # math; looser sanity check against the pure-f32 module semantics.
    ref_bf16 = _reference_forward(x, w_enc, b_enc, w_dec, b_dec, bf16_operands=True)
    assert jnp.allclose(out, ref_bf16, atol=2e-3, rtol=2e-3)
    ref_f32 = _reference_forward(x, w_enc, b_enc, w_dec, b_dec, bf16_operands=False)
    assert jnp.allclose(out, ref_f32, atol=1.5e-1, rtol=5e-2)

    print("KERNEL_OK")
</pallas_src>

<mosaic_0001>
module attributes {stable_mosaic.version = 11 : i64} {
  func.func @_ae_kernel(%arg0: i32, %arg1: i32, %arg2: memref<2x3x128xf32, #tpu.memory_space<vmem>>, %arg3: memref<23x3xbf16, #tpu.memory_space<vmem>>, %arg4: memref<23x1xf32, #tpu.memory_space<vmem>>, %arg5: memref<3x23xbf16, #tpu.memory_space<vmem>>, %arg6: memref<3x1xf32, #tpu.memory_space<vmem>>, %arg7: memref<2x3x128xf32, #tpu.memory_space<vmem>>) attributes {dimension_semantics = [#tpu.dimension_semantics<parallel>, #tpu.dimension_semantics<parallel>], iteration_bounds = array<i64: 1, 2>, scalar_prefetch = 0 : i64, scratch_operands = 0 : i64, tpu.core_type = #tpu.core_type<tc>, window_params = [{transform_indices = @transform_0, window_bounds = array<i64: 2, 3, 128>}, {pipeline_mode = #tpu.pipeline_mode<synchronous>, transform_indices = @transform_1, window_bounds = array<i64: 23, 3>}, {pipeline_mode = #tpu.pipeline_mode<synchronous>, transform_indices = @transform_2, window_bounds = array<i64: 23, 1>}, {pipeline_mode = #tpu.pipeline_mode<synchronous>, transform_indices = @transform_3, window_bounds = array<i64: 3, 23>}, {pipeline_mode = #tpu.pipeline_mode<synchronous>, transform_indices = @transform_4, window_bounds = array<i64: 3, 1>}, {transform_indices = @transform_5, window_bounds = array<i64: 2, 3, 128>}]} {
    %c0 = arith.constant 0 : index
    %c0_0 = arith.constant 0 : index
    %0 = vector.load %arg3[%c0, %c0_0] : memref<23x3xbf16, #tpu.memory_space<vmem>>, vector<23x3xbf16>
    %c0_1 = arith.constant 0 : index
    %c0_2 = arith.constant 0 : index
    %1 = vector.load %arg5[%c0_1, %c0_2] : memref<3x23xbf16, #tpu.memory_space<vmem>>, vector<3x23xbf16>
    %c0_3 = arith.constant 0 : index
    %c0_4 = arith.constant 0 : index
    %2 = vector.load %arg4[%c0_3, %c0_4] : memref<23x1xf32, #tpu.memory_space<vmem>>, vector<23x1xf32>
    %c0_5 = arith.constant 0 : index
    %c0_6 = arith.constant 0 : index
    %3 = vector.load %arg6[%c0_5, %c0_6] : memref<3x1xf32, #tpu.memory_space<vmem>>, vector<3x1xf32>
    %c0_7 = arith.constant 0 : index
    %c0_8 = arith.constant 0 : index
    %c0_9 = arith.constant 0 : index
    %4 = vector.load %arg2[%c0_7, %c0_8, %c0_9] : memref<2x3x128xf32, #tpu.memory_space<vmem>>, vector<1x3x128xf32>
    %5 = vector.shape_cast %4 : vector<1x3x128xf32> to vector<3x128xf32>
    %6 = arith.truncf %5 : vector<3x128xf32> to vector<3x128xbf16>
    %cst = arith.constant dense<0.000000e+00> : vector<23x128xf32>
    %7 = tpu.matmul %0, %6, %cst {dimension_numbers = #tpu.dot_dimension_numbers<[1], [0], [0], [1], [0, 0, 1, 1], [], []>} : vector<23x3xbf16>, vector<3x128xbf16>, vector<23x128xf32> -> vector<23x128xf32>
    %8 = vector.broadcast %2 : vector<23x1xf32> to vector<23x128xf32>
    %9 = arith.addf %7, %8 : vector<23x128xf32>
    %cst_10 = arith.constant 0.000000e+00 : f32
    %10 = vector.broadcast %cst_10 : f32 to vector<23x128xf32>
    %11 = arith.maximumf %9, %10 : vector<23x128xf32>
    %12 = arith.truncf %11 : vector<23x128xf32> to vector<23x128xbf16>
    %cst_11 = arith.constant dense<0.000000e+00> : vector<3x128xf32>
    %13 = tpu.matmul %1, %12, %cst_11 {dimension_numbers = #tpu.dot_dimension_numbers<[1], [0], [0], [1], [0, 0, 1, 1], [], []>} : vector<3x23xbf16>, vector<23x128xbf16>, vector<3x128xf32> -> vector<3x128xf32>
    %14 = vector.broadcast %3 : vector<3x1xf32> to vector<3x128xf32>
    %15 = arith.addf %13, %14 : vector<3x128xf32>
    %c0_12 = arith.constant 0 : index
    %c0_13 = arith.constant 0 : index
    %c0_14 = arith.constant 0 : index
    %16 = vector.load %arg7[%c0_12, %c0_13, %c0_14] : memref<2x3x128xf32, #tpu.memory_space<vmem>>, vector<1x3x128xf32>
    %17 = vector.shape_cast %16 : vector<1x3x128xf32> to vector<3x128xf32>
    %18 = vector.shape_cast %15 : vector<3x128xf32> to vector<1x3x128xf32>
    tpu.vector_store %arg7[%c0_12, %c0_13, %c0_14], %18 {strides = array<i32>} : memref<2x3x128xf32, #tpu.memory_space<vmem>>, vector<1x3x128xf32>,
    %c1 = arith.constant 1 : index
    %c0_15 = arith.constant 0 : index
    %c0_16 = arith.constant 0 : index
    %19 = vector.load %arg2[%c1, %c0_15, %c0_16] : memref<2x3x128xf32, #tpu.memory_space<vmem>>, vector<1x3x128xf32>
    %20 = vector.shape_cast %19 : vector<1x3x128xf32> to vector<3x128xf32>
    %21 = arith.truncf %20 : vector<3x128xf32> to vector<3x128xbf16>
    %cst_17 = arith.constant dense<0.000000e+00> : vector<23x128xf32>
    %22 = tpu.matmul %0, %21, %cst_17 {dimension_numbers = #tpu.dot_dimension_numbers<[1], [0], [0], [1], [0, 0, 1, 1], [], []>} : vector<23x3xbf16>, vector<3x128xbf16>, vector<23x128xf32> -> vector<23x128xf32>
    %23 = vector.broadcast %2 : vector<23x1xf32> to vector<23x128xf32>
    %24 = arith.addf %22, %23 : vector<23x128xf32>
    %cst_18 = arith.constant 0.000000e+00 : f32
    %25 = vector.broadcast %cst_18 : f32 to vector<23x128xf32>
    %26 = arith.maximumf %24, %25 : vector<23x128xf32>
    %27 = arith.truncf %26 : vector<23x128xf32> to vector<23x128xbf16>
    %cst_19 = arith.constant dense<0.000000e+00> : vector<3x128xf32>
    %28 = tpu.matmul %1, %27, %cst_19 {dimension_numbers = #tpu.dot_dimension_numbers<[1], [0], [0], [1], [0, 0, 1, 1], [], []>} : vector<3x23xbf16>, vector<23x128xbf16>, vector<3x128xf32> -> vector<3x128xf32>
    %29 = vector.broadcast %3 : vector<3x1xf32> to vector<3x128xf32>
    %30 = arith.addf %28, %29 : vector<3x128xf32>
    %c1_20 = arith.constant 1 : index
    %c0_21 = arith.constant 0 : index
    %c0_22 = arith.constant 0 : index
    %31 = vector.load %arg7[%c1_20, %c0_21, %c0_22] : memref<2x3x128xf32, #tpu.memory_space<vmem>>, vector<1x3x128xf32>
    %32 = vector.shape_cast %31 : vector<1x3x128xf32> to vector<3x128xf32>
    %33 = vector.shape_cast %30 : vector<3x128xf32> to vector<1x3x128xf32>
    tpu.vector_store %arg7[%c1_20, %c0_21, %c0_22], %33 {strides = array<i32>} : memref<2x3x128xf32, #tpu.memory_space<vmem>>, vector<1x3x128xf32>,
    return
  }
  func.func @transform_0(%arg0: i32, %arg1: i32) -> (i32, i32, i32) {
    %c0_i32 = arith.constant 0 : i32
    %c0_i32_0 = arith.constant 0 : i32
    return %arg0, %c0_i32, %arg1 : i32, i32, i32
  }
  func.func @transform_1(%arg0: i32, %arg1: i32) -> (i32, i32) {
    %c0_i32 = arith.constant 0 : i32
    %c0_i32_0 = arith.constant 0 : i32
    %c0_i32_1 = arith.constant 0 : i32
    return %c0_i32, %c0_i32_0 : i32, i32
  }
  func.func @transform_2(%arg0: i32, %arg1: i32) -> (i32, i32) {
    %c0_i32 = arith.constant 0 : i32
    %c0_i32_0 = arith.constant 0 : i32
    %c0_i32_1 = arith.constant 0 : i32
    return %c0_i32, %c0_i32_0 : i32, i32
  }
  func.func @transform_3(%arg0: i32, %arg1: i32) -> (i32, i32) {
    %c0_i32 = arith.constant 0 : i32
    %c0_i32_0 = arith.constant 0 : i32
    %c0_i32_1 = arith.constant 0 : i32
    return %c0_i32, %c0_i32_0 : i32, i32
  }
  func.func @transform_4(%arg0: i32, %arg1: i32) -> (i32, i32) {
    %c0_i32 = arith.constant 0 : i32
    %c0_i32_0 = arith.constant 0 : i32
    %c0_i32_1 = arith.constant 0 : i32
    return %c0_i32, %c0_i32_0 : i32, i32
  }
  func.func @transform_5(%arg0: i32, %arg1: i32) -> (i32, i32, i32) {
    %c0_i32 = arith.constant 0 : i32
    %c0_i32_0 = arith.constant 0 : i32
    return %arg0, %c0_i32, %arg1 : i32, i32, i32
  }
}

</mosaic_0001>

<llo_original>
// kernel: autoencoder_forward.1
$region0: #{autoencoder_forward.1}
  #allocation0 [shape = 'u32[]', space=smem, size = 0x4, offset = 0x4, fixed_abs, tag = 'smem constant byte address 0x4 - core index']
  #allocation1 [shape = 'u32[144,128]{1,0:T(1,128)}', space=vmem, size = 0x12000, scoped, tag = 'internal scratch']
  %s0 = inlined_call_operand.vmem [shape: f32[2,3,256], index: 0, kind: input, shape index: {}]
  %s1 = inlined_call_operand.vmem [shape: bf16[23,3], index: 1, kind: input, shape index: {}]
  %s2 = inlined_call_operand.vmem [shape: f32[23,1], index: 2, kind: input, shape index: {}]
  %s3 = inlined_call_operand.vmem [shape: bf16[3,23], index: 3, kind: input, shape index: {}]
  %s4 = inlined_call_operand.vmem [shape: f32[3,1], index: 4, kind: input, shape index: {}]
  %s5 = inlined_call_operand.vmem [shape: f32[2,3,256], index: 5, kind: output, shape index: {}]
  %s6 = sld [smem:[#allocation0]]
  $region131: #{autoencoder_forward.1} parent=0
    _
  %s8 = ssub.s32 1, %s6
  %s9 = scalar_select 0, %s8, %s6
  $region1: #{autoencoder_forward.1} parent=0
    #allocation2 [shape = 'u8[8192]{0}', space=vmem, size = 0x2000, scoped, tag = 'input window, operand 0']
    #allocation3 [shape = 'u8[8192]{0}', space=vmem, size = 0x2000, scoped, tag = 'output window, operand 0']
    loop: start=0, step=1, limit=4
    $region2: #{autoencoder_forward.1} parent=1 // loop_pre_header
      _
    $region3: #{autoencoder_forward.1} parent=1 // loop_header
      %s11 = sphi 0, %s15
      %p12 = scmp.ge.s32.totalorder %s11, 4
      %s18 = sphi 0, %s30
      %s19 = sphi 0, %s26
      %s20 = sphi 0, %s18
      %s21 = sphi 0, %s19
      %s22 = sphi 0, %s20
      %s23 = sphi 0, %s21
      %s35 = sphi 0, %s37
      %s38 = sphi 0, %s35
      %s39 = sphi 0, %s38
      %s55 = sphi 0, %s39
      %s59 = sphi 0, %s59
      %s61 = sphi 0, %s59
      %s62 = sphi 0, %s61
      %s76 = sphi 0, %s62
      %s80 = sphi 0, %s80
      %s82 = sphi 0, %s80
      %s83 = sphi 0, %s82
      %s97 = sphi 0, %s83
      %s101 = sphi 0, %s101
      %s103 = sphi 0, %s101
      %s104 = sphi 0, %s103
      %s118 = sphi 0, %s104
      %s122 = sphi 0, %s122
      %s124 = sphi 0, %s122
      %s125 = sphi 0, %s124
      %s139 = sphi 0, %s125
      %s147 = sphi 0, %s149
      %s150 = sphi 0, %s147
      %s151 = sphi 0, %s150
      %s167 = sphi 0, %s151
    $region4: #{autoencoder_forward.1} parent=1 // loop_header_branch
      %14 = sbr.rel (%p12) target = $region8
    $region5: #{autoencoder_forward.1} parent=1 // loop_body
      %s16 = ssub.s32 %s11, 1
      %s17 = ssub.s32 %s11, 2
      %s24 = sadd.s32 1, %s19
      %p25 = scmp.ge.s32.totalorder %s24, 2
      %s26 = scalar_select %p25, 0, %s24
      %s27 = sadd.s32 1, %s18
      %s28 = scalar_select %p25, %s27, %s18
      %p29 = scmp.ge.s32.totalorder %s28, 1
      %s30 = scalar_select %p29, 0, %s28
      %s31 = ssub.s32 %s18, %s30
      %s32 = ssub.s32 %s19, %s26
      %s33 = sor.u32 %s31, %s32
      %p34 = scmp.eq.s32.totalorder %s33, 0
      %s36 = sadd.s32 %s35, 1
      %s37 = scalar_select %p34, %s35, %s36
      %p40 = pneg %p34
      %p41 = scmp.eq.s32.totalorder %s11, 1
      %p42 = por %p40, %p41
      %p43 = scmp.ne.s32.totalorder %s35, %s38
      %p44 = scmp.eq.s32.totalorder %s11, 0
      %p45 = por %p43, %p44
      %p46 = scmp.ne.s32.totalorder %s35, %s38
      %p47 = scmp.eq.s32.totalorder %s16, 1
      %p48 = por %p46, %p47
      %p49 = scmp.ne.s32.totalorder %s38, %s39
      %p50 = scmp.eq.s32.totalorder %s16, 0
      %p51 = por %p49, %p50
      %p52 = scmp.ne.s32.totalorder %s38, %s39
      %p53 = scmp.eq.s32.totalorder %s17, 1
      %p54 = por %p52, %p53
      %p56 = scmp.ne.s32.totalorder %s39, %s55
      %p57 = scmp.eq.s32.totalorder %s17, 0
      %p58 = por %p56, %p57
      %s60 = sadd.s32 %s59, 1
      %p63 = scmp.eq.s32.totalorder %s11, 1
      %p64 = scmp.ne.s32.totalorder %s59, %s61
      %p65 = scmp.eq.s32.totalorder %s11, 0
      %p66 = por %p64, %p65
      %p67 = scmp.ne.s32.totalorder %s59, %s61
      %p68 = scmp.eq.s32.totalorder %s16, 1
      %p69 = por %p67, %p68
      %p70 = scmp.ne.s32.totalorder %s61, %s62
      %p71 = scmp.eq.s32.totalorder %s16, 0
      %p72 = por %p70, %p71
      %p73 = scmp.ne.s32.totalorder %s61, %s62
      %p74 = scmp.eq.s32.totalorder %s17, 1
      %p75 = por %p73, %p74
      %p77 = scmp.ne.s32.totalorder %s62, %s76
      %p78 = scmp.eq.s32.totalorder %s17, 0
      %p79 = por %p77, %p78
      %s81 = sadd.s32 %s80, 1
      %p84 = scmp.eq.s32.totalorder %s11, 1
      %p85 = scmp.ne.s32.totalorder %s80, %s82
      %p86 = scmp.eq.s32.totalorder %s11, 0
      %p87 = por %p85, %p86
      %p88 = scmp.ne.s32.totalorder %s80, %s82
      %p89 = scmp.eq.s32.totalorder %s16, 1
      %p90 = por %p88, %p89
      %p91 = scmp.ne.s32.totalorder %s82, %s83
      %p92 = scmp.eq.s32.totalorder %s16, 0
      %p93 = por %p91, %p92
      %p94 = scmp.ne.s32.totalorder %s82, %s83
      %p95 = scmp.eq.s32.totalorder %s17, 1
      %p96 = por %p94, %p95
      %p98 = scmp.ne.s32.totalorder %s83, %s97
      %p99 = scmp.eq.s32.totalorder %s17, 0
      %p100 = por %p98, %p99
      %s102 = sadd.s32 %s101, 1
      %p105 = scmp.eq.s32.totalorder %s11, 1
      %p106 = scmp.ne.s32.totalorder %s101, %s103
      %p107 = scmp.eq.s32.totalorder %s11, 0
      %p108 = por %p106, %p107
      %p109 = scmp.ne.s32.totalorder %s101, %s103
      %p110 = scmp.eq.s32.totalorder %s16, 1
      %p111 = por %p109, %p110
      %p112 = scmp.ne.s32.totalorder %s103, %s104
      %p113 = scmp.eq.s32.totalorder %s16, 0
      %p114 = por %p112, %p113
      %p115 = scmp.ne.s32.totalorder %s103, %s104
      %p116 = scmp.eq.s32.totalorder %s17, 1
      %p117 = por %p115, %p116
      %p119 = scmp.ne.s32.totalorder %s104, %s118
      %p120 = scmp.eq.s32.totalorder %s17, 0
      %p121 = por %p119, %p120
      %s123 = sadd.s32 %s122, 1
      %p126 = scmp.eq.s32.totalorder %s11, 1
      %p127 = scmp.ne.s32.totalorder %s122, %s124
      %p128 = scmp.eq.s32.totalorder %s11, 0
      %p129 = por %p127, %p128
      %p130 = scmp.ne.s32.totalorder %s122, %s124
      %p131 = scmp.eq.s32.totalorder %s16, 1
      %p132 = por %p130, %p131
      %p133 = scmp.ne.s32.totalorder %s124, %s125
      %p134 = scmp.eq.s32.totalorder %s16, 0
      %p135 = por %p133, %p134
      %p136 = scmp.ne.s32.totalorder %s124, %s125
      %p137 = scmp.eq.s32.totalorder %s17, 1
      %p138 = por %p136, %p137
      %p140 = scmp.ne.s32.totalorder %s125, %s139
      %p141 = scmp.eq.s32.totalorder %s17, 0
      %p142 = por %p140, %p141
      %s143 = ssub.s32 %s18, %s30
      %s144 = ssub.s32 %s19, %s26
      %s145 = sor.u32 %s143, %s144
      %p146 = scmp.eq.s32.totalorder %s145, 0
      %s148 = sadd.s32 %s147, 1
      %s149 = scalar_select %p146, %s147, %s148
      %p152 = pneg %p146
      %p153 = scmp.eq.s32.totalorder %s11, 1
      %p154 = por %p152, %p153
      %p155 = scmp.ne.s32.totalorder %s147, %s150
      %p156 = scmp.eq.s32.totalorder %s11, 0
      %p157 = por %p155, %p156
      %p158 = scmp.ne.s32.totalorder %s147, %s150
      %p159 = scmp.eq.s32.totalorder %s16, 1
      %p160 = por %p158, %p159
      %p161 = scmp.ne.s32.totalorder %s150, %s151
      %p162 = scmp.eq.s32.totalorder %s16, 0
      %p163 = por %p161, %p162
      %p164 = scmp.ne.s32.totalorder %s150, %s151
      %p165 = scmp.eq.s32.totalorder %s17, 1
      %p166 = por %p164, %p165
      %p168 = scmp.ne.s32.totalorder %s151, %s167
      %p169 = scmp.eq.s32.totalorder %s17, 0
      %p170 = por %p168, %p169
      %p171 = scmp.le.s32.totalorder 1, %s11
      %p172 = scmp.lt.s32.totalorder %s11, 3
      %p173 = pnand %p171, %p172
      %p174 = pneg %p173
      // Predicated region
      $region9: #{autoencoder_forward.1} parent=5 // pred_check
        _
      $region10: #{autoencoder_forward.1} parent=5 // pred_check_branch
        %176 = sbr.rel (%p173) target = $region12
      $region11: #{autoencoder_forward.1} parent=5 // pred_region
        %s177 = ssub.s32 %s11, 1
        // Predicated region
        $region13: #{autoencoder_forward.1} parent=11 // pred_check
          %p178 = pneg %p72
        $region14: #{autoencoder_forward.1} parent=11 // pred_check_branch
          %180 = sbr.rel (%p178) target = $region16
        $region15: #{autoencoder_forward.1} parent=11 // pred_region
          _
        $region16: #{autoencoder_forward.1} parent=11 // pred_fallthru
          _
        // Predicated region
        $region17: #{autoencoder_forward.1} parent=11 // pred_check
          %p181 = pneg %p93
        $region18: #{autoencoder_forward.1} parent=11 // pred_check_branch
          %183 = sbr.rel (%p181) target = $region20
        $region19: #{autoencoder_forward.1} parent=11 // pred_region
          _
        $region20: #{autoencoder_forward.1} parent=11 // pred_fallthru
          _
        // Predicated region
        $region21: #{autoencoder_forward.1} parent=11 // pred_check
          %p184 = pneg %p114
        $region22: #{autoencoder_forward.1} parent=11 // pred_check_branch
          %186 = sbr.rel (%p184) target = $region24
        $region23: #{autoencoder_forward.1} parent=11 // pred_region
          _
        $region24: #{autoencoder_forward.1} parent=11 // pred_fallthru
          _
        // Predicated region
        $region25: #{autoencoder_forward.1} parent=11 // pred_check
          %p187 = pneg %p135
        $region26: #{autoencoder_forward.1} parent=11 // pred_check_branch
          %189 = sbr.rel (%p187) target = $region28
        $region27: #{autoencoder_forward.1} parent=11 // pred_region
          _
        $region28: #{autoencoder_forward.1} parent=11 // pred_fallthru
          _
      $region12: #{autoencoder_forward.1} parent=5 // pred_fallthru
        _
      %p190 = scmp.lt.s32.totalorder %s11, 2
      // Predicated region
      $region29: #{autoencoder_forward.1} parent=5 // pred_check
        %p191 = pneg %p190
      $region30: #{autoencoder_forward.1} parent=5 // pred_check_branch
        %193 = sbr.rel (%p191) target = $region32
      $region31: #{autoencoder_forward.1} parent=5 // pred_region
        // Predicated region
        $region33: #{autoencoder_forward.1} parent=31 // pred_check
          %p194 = pneg %p45
        $region34: #{autoencoder_forward.1} parent=31 // pred_check_branch
          %196 = sbr.rel (%p194) target = $region36
        $region35: #{autoencoder_forward.1} parent=31 // pred_region
          %s197 = sand.u32 %s35, 1
          %s198 = sand.u32 %s35, 1
          %s199 = smul.addr %s198, 8
          %s200 = scalar_lea.vmem [#allocation2], %s199
          %s201 = smul.u32 2, %s18
          %s202 = smul.addr %s201, 2
          %s203 = sadd.s32 %s19, %s202
          %s204 = smul.addr %s203, 4
          %s205 = scalar_lea.vmem %s0, %s204
          // Predicated region
          $region37: #{autoencoder_forward.1} parent=35 // pred_check
            _
          $region38: #{autoencoder_forward.1} parent=35 // pred_check_branch
            %207 = sbr.rel (0) target = $region40
          $region39: #{autoencoder_forward.1} parent=35 // pred_region
            // Predicated region
            $region41: #{autoencoder_forward.1} parent=39 // pred_check
              _
            $region42: #{autoencoder_forward.1} parent=39 // pred_check_branch
              %209 = sbr.rel target = $region44
            $region43: #{autoencoder_forward.1} parent=39 // pred_region
              // Predicated region
              $region56: #{autoencoder_forward.1} parent=43 // pred_check
                _
              $region57: #{autoencoder_forward.1} parent=43 // pred_check_branch
                %226 = sbr.rel (0) target = $region59
              $region58: #{autoencoder_forward.1} parent=43 // pred_region
                loop: start=0, step=1, limit=1
                $region60: #{autoencoder_forward.1} parent=58 // loop_pre_header
                  _
                $region61: #{autoencoder_forward.1} parent=58 // loop_header
                  %s228 = sphi 0, %s232
                  %p229 = scmp.ge.s32.totalorder %s228, 1
                  %s233 = sphi %s205, %s205
                  %s234 = sphi %s200, %s200
                $region62: #{autoencoder_forward.1} parent=58 // loop_header_branch
                  %231 = sbr.rel (%p229) target = $region66
                $region63: #{autoencoder_forward.1} parent=58 // loop_body
                  _
                $region64: #{autoencoder_forward.1} parent=58 // loop_footer
                  %s232 = sadd.s32 1, %s228
                $region65: #{autoencoder_forward.1} parent=58 // loop_footer_branch
                  %227 = sbr.rel target = $region61
                $region66: #{autoencoder_forward.1} parent=58 // loop_exit
                  _
                loop: start=0, step=1, limit=1
                $region67: #{autoencoder_forward.1} parent=58 // loop_pre_header
                  _
                $region68: #{autoencoder_forward.1} parent=58 // loop_header
                  %s237 = sphi 0, %s241
                  %p238 = scmp.ge.s32.totalorder %s237, 1
                  %s242 = sphi %s205, %s205
                  %s243 = sphi %s200, %s200
                $region69: #{autoencoder_forward.1} parent=58 // loop_header_branch
                  %240 = sbr.rel (%p238) target = $region73
                $region70: #{autoencoder_forward.1} parent=58 // loop_body
                  %v244 = vld [vmem:[%s242] sm:$0xf]
                  %245 = vst [vmem:[%s243] sm:$0xf] %v244
                  %v246 = vld [vmem:[%s242 + $0x8] sm:$0xf]
                  %247 = vst [vmem:[%s243 + $0x4] sm:$0xf] %v246
                $region71: #{autoencoder_forward.1} parent=58 // loop_footer
                  %s241 = sadd.s32 1, %s237
                $region72: #{autoencoder_forward.1} parent=58 // loop_footer_branch
                  %236 = sbr.rel target = $region68
                $region73: #{autoencoder_forward.1} parent=58 // loop_exit
                  _
              $region59: #{autoencoder_forward.1} parent=43 // pred_fallthru
                _
            $region44: #{autoencoder_forward.1} parent=39 // pred_fallthru
              _
            // Predicated region
            $region45: #{autoencoder_forward.1} parent=39 // pred_check
              _
            $region46: #{autoencoder_forward.1} parent=39 // pred_check_branch
              %211 = sbr.rel (0) target = $region48
            $region47: #{autoencoder_forward.1} parent=39 // pred_region
              loop: start=0, step=1, limit=1
              $region49: #{autoencoder_forward.1} parent=47 // loop_pre_header
                _
              $region50: #{autoencoder_forward.1} parent=47 // loop_header
                %s214 = sphi 0, %s218
                %p215 = scmp.ge.s32.totalorder %s214, 1
                %s219 = sphi %s205, %s205
                %s220 = sphi %s200, %s200
              $region51: #{autoencoder_forward.1} parent=47 // loop_header_branch
                %217 = sbr.rel (%p215) target = $region55
              $region52: #{autoencoder_forward.1} parent=47 // loop_body
                %v221 = vld [vmem:[%s219] sm:$0xf]
                %222 = vst [vmem:[%s220] sm:$0xf] %v221
                %v223 = vld [vmem:[%s219 + $0x8] sm:$0xf]
                %224 = vst [vmem:[%s220 + $0x4] sm:$0xf] %v223
              $region53: #{autoencoder_forward.1} parent=47 // loop_footer
                %s218 = sadd.s32 1, %s214
              $region54: #{autoencoder_forward.1} parent=47 // loop_footer_branch
                %213 = sbr.rel target = $region50
              $region55: #{autoencoder_forward.1} parent=47 // loop_exit
                _
            $region48: #{autoencoder_forward.1} parent=39 // pred_fallthru
              _
          $region40: #{autoencoder_forward.1} parent=35 // pred_fallthru
            _
          %248 = vnop
        $region36: #{autoencoder_forward.1} parent=31 // pred_fallthru
          _
      $region32: #{autoencoder_forward.1} parent=5 // pred_fallthru
        _
      %p249 = scmp.le.s32.totalorder 1, %s11
      %p250 = scmp.lt.s32.totalorder %s11, 3
      %p251 = pnand %p249, %p250
      %p252 = pneg %p251
      // Predicated region
      $region74: #{autoencoder_forward.1} parent=5 // pred_check
        _
      $region75: #{autoencoder_forward.1} parent=5 // pred_check_branch
        %254 = sbr.rel (%p251) target = $region77
      $region76: #{autoencoder_forward.1} parent=5 // pred_region
        %s255 = ssub.s32 %s11, 1
        %s256 = sand.u32 %s38, 1
        %s257 = sand.u32 %s38, 1
        %s258 = smul.addr %s257, 8
        %s259 = scalar_lea.vmem [#allocation2], %s258
        // Predicated region
        $region78: #{autoencoder_forward.1} parent=76 // pred_check
          %p260 = pneg %p51
        $region79: #{autoencoder_forward.1} parent=76 // pred_check_branch
          %262 = sbr.rel (%p260) target = $region81
        $region80: #{autoencoder_forward.1} parent=76 // pred_region
          _
        $region81: #{autoencoder_forward.1} parent=76 // pred_fallthru
          _
        %s263 = sand.u32 %s38, 1
        %s264 = sand.u32 %s38, 1
        %s265 = smul.addr %s264, 8
        %s266 = scalar_lea.vmem [#allocation2], %s265
        %p267 = pneg %p51
        %p268 = pneg %p48
        %p269 = pneg %p72
        %p270 = pneg %p69
        %p271 = pneg %p93
        %p272 = pneg %p90
        %p273 = pneg %p114
        %p274 = pneg %p111
        %p275 = pneg %p135
        %p276 = pneg %p132
        %p277 = pneg %p163
        %p278 = pneg %p160
        %s279 = sand.u32 %s150, 1
        %s280 = sand.u32 %s150, 1
        %s281 = smul.addr %s280, 8
        %s282 = scalar_lea.vmem [#allocation3], %s281
        %s283 = smul.u32 2, %s20
        %s284 = smul.u32 2, %s20
        %v286 = vld [vmem:[%s1] sm:$0xf]
        %v287 = vld [vmem:[%s1 + $0x4] sm:$0xf]
        %v288 = vld [vmem:[%s1 + $0x8] sm:$0xf]
        %v289 = vld [vmem:[%s3] sm:$0x3]
        %v290 = vld [vmem:[%s2] sm:$0xff]
        %v291 = vld [vmem:[%s2 + $0x8] sm:$0xff]
        %v292 = vld [vmem:[%s2 + $0x10] sm:$0x7f]
        %v293 = vld [vmem:[%s4] sm:$0x7]
        %v294 = vld [vmem:[%s259] sm:$0x7]
        %v295 = vpack.c.bf16 %v294, %v294
        %297 = vset.pattern.permute.xlu0 0
        %298 = vperm.xlu0 %297, %v290
        %v299 = vpop.permute.xlu0 %298
        %302 = vset.pattern.permute.xlu0 0
        %303 = vperm.xlu0 %302, %v291
        %v304 = vpop.permute.xlu0 %303
        %307 = vset.pattern.permute.xlu0 0
        %308 = vperm.xlu0 %307, %v292
        %v309 = vpop.permute.xlu0 %308
        %v314 = vunpack.c.l.b16 %v286
        %v315 = vunpack.c.l.b16 %v287
        %v316 = vunpack.c.l.b16 %v288
        %v317 = vpack.c.b16 %v315, %v314
        %v318 = vpack.c.b16 %v316, %v316
        %vm319 = vcmask 23552
        %v321 = vsel %vm319, %v317, 0
        %v324 = vsel %vm319, %v318, 0
        %vm326 = vcmask 1040384
        %vm327 = vcmask 1041408
        %v328 = vsel %vm326, 4294967295, 65535
        %v329 = vsel %vm327, %v328, 0
        %v331 = vand.u32 %v295, %v329
        %333 = vmatprep.subr.bf16.mxu0 0
        %334 = vmatpush1.bf16.msra.mxu0 %v331
        %335 = vmatprep.subr.bf16.mxu0 0
        %336 = vmatpush1.bf16.msra.mxu0 0
        %337 = vmatprep.subr.bf16.mxu0 0
        %338 = vmatpush1.bf16.msra.mxu0 0
        %339 = vmatprep.subr.bf16.mxu0 0
        %340 = vmatpush1.bf16.msra.mxu0 0
        %341 = vmatprep.subr.bf16.mxu0 0
        %342 = vmatpush1.bf16.msra.mxu0 0
        %343 = vmatprep.subr.bf16.mxu0 0
        %344 = vmatpush1.bf16.msra.mxu0 0
        %345 = vmatprep.subr.bf16.mxu0 0
        %346 = vmatpush1.bf16.msra.mxu0 0
        %347 = vmatprep.subr.bf16.mxu0 0
        %348 = vmatpush1.bf16.msra.mxu0 0
        %349 = vmatprep.subr.bf16.mxu0 0
        %350 = vmatpush1.bf16.msra.mxu0 0
        %351 = vmatprep.subr.bf16.mxu0 0
        %352 = vmatpush1.bf16.msra.mxu0 0
        %353 = vmatprep.subr.bf16.mxu0 0
        %354 = vmatpush1.bf16.msra.mxu0 0
        %355 = vmatprep.subr.bf16.mxu0 0
        %356 = vmatpush1.bf16.msra.mxu0 0
        %357 = vmatprep.subr.bf16.mxu0 0
        %358 = vmatpush1.bf16.msra.mxu0 0
        %359 = vmatprep.subr.bf16.mxu0 0
        %360 = vmatpush1.bf16.msra.mxu0 0
        %361 = vmatprep.subr.bf16.mxu0 0
        %362 = vmatpush1.bf16.msra.mxu0 0
        %363 = vmatprep.subr.bf16.mxu0 0
        %364 = vmatpush1.bf16.msra.mxu0 0
        %365 = vmatprep.mubr.bf16.mxu0 0
        %366 = vmatmul.mubr.bf16.gmra.mrb[0].mxu0 %v321
        %v367 = vpop.f32.mrb[0].mxu0
        %v368 = vadd.f32 %v299, %v367
        %v369 = vpop.f32.mrb[0].mxu0
        %v370 = vpop.f32.mrb[0].mxu0
        %v371 = vadd.f32 %v304, %v370
        %v372 = vpop.f32.mrb[0].mxu0
        %373 = vmatprep.mubr.bf16.mxu0 0
        %374 = vmatmul.mubr.bf16.gmra.mrb[0].mxu0 %v324
        %v375 = vpop.f32.mrb[0].mxu0
        %v376 = vadd.f32 %v309, %v375
        %v377 = vpop.f32.mrb[0].mxu0
        %v378 = vpop.f32.mrb[0].mxu0
        %v379 = vpop.f32.mrb[0].mxu0
        %380 = vdwg.mxu0
        %v381 = vmax.f32 %v368, 0.0
        %v382 = vmax.f32 %v371, 0.0
        %v383 = vmax.f32 %v376, 0.0
        %v384 = vpack.c.bf16 %v382, %v381
        %v385 = vpack.c.bf16 %v383, %v383
        %387 = vset.pattern.permute.xlu0 0
        %388 = vperm.xlu0 %387, %v293
        %v389 = vpop.permute.xlu0 %388
        %vm391 = vcmask 187392
        %v393 = vsel %vm391, %v289, 0
        %vm395 = vcmask 1042432
        %vm396 = vcmask 1043456
        %v397 = vsel %vm395, 4294967295, 65535
        %v398 = vsel %vm396, %v397, 0
        %v400 = vand.u32 %v385, %v398
        %402 = vmatprep.subr.bf16.mxu0 0
        %403 = vmatpush1.bf16.msra.mxu0 %v384
        %404 = vmatprep.subr.bf16.mxu0 0
        %405 = vmatpush1.bf16.msra.mxu0 %v400
        %406 = vmatprep.subr.bf16.mxu0 0
        %407 = vmatpush1.bf16.msra.mxu0 0
        %408 = vmatprep.subr.bf16.mxu0 0
        %409 = vmatpush1.bf16.msra.mxu0 0
        %410 = vmatprep.subr.bf16.mxu0 0
        %411 = vmatpush1.bf16.msra.mxu0 0
        %412 = vmatprep.subr.bf16.mxu0 0
        %413 = vmatpush1.bf16.msra.mxu0 0
        %414 = vmatprep.subr.bf16.mxu0 0
        %415 = vmatpush1.bf16.msra.mxu0 0
        %416 = vmatprep.subr.bf16.mxu0 0
        %417 = vmatpush1.bf16.msra.mxu0 0
        %418 = vmatprep.subr.bf16.mxu0 0
        %419 = vmatpush1.bf16.msra.mxu0 0
        %420 = vmatprep.subr.bf16.mxu0 0
        %421 = vmatpush1.bf16.msra.mxu0 0
        %422 = vmatprep.subr.bf16.mxu0 0
        %423 = vmatpush1.bf16.msra.mxu0 0
        %424 = vmatprep.subr.bf16.mxu0 0
        %425 = vmatpush1.bf16.msra.mxu0 0
        %426 = vmatprep.subr.bf16.mxu0 0
        %427 = vmatpush1.bf16.msra.mxu0 0
        %428 = vmatprep.subr.bf16.mxu0 0
        %429 = vmatpush1.bf16.msra.mxu0 0
        %430 = vmatprep.subr.bf16.mxu0 0
        %431 = vmatpush1.bf16.msra.mxu0 0
        %432 = vmatprep.subr.bf16.mxu0 0
        %433 = vmatpush1.bf16.msra.mxu0 0
        %434 = vmatprep.mubr.bf16.mxu0 0
        %435 = vmatmul.mubr.bf16.gmra.mrb[0].mxu0 %v393
        %v436 = vpop.f32.mrb[0].mxu0
        %v437 = vadd.f32 %v389, %v436
        %v438 = vpop.f32.mrb[0].mxu0
        %v439 = vpop.f32.mrb[0].mxu0
        %v440 = vpop.f32.mrb[0].mxu0
        %441 = vdwg.mxu0
        %442 = vst [vmem:[%s282] sm:$0x7] %v437
        %s443 = scalar_lea.vmem %s259, 4 [#allocation2]
        %v444 = vld [vmem:[%s443] sm:$0x7]
        %v445 = vpack.c.bf16 %v444, %v444
        %v447 = vand.u32 %v445, %v329
        %449 = vmatprep.subr.bf16.mxu0 0
        %450 = vmatpush1.bf16.msra.mxu0 %v447
        %451 = vmatprep.subr.bf16.mxu0 0
        %452 = vmatpush1.bf16.msra.mxu0 0
        %453 = vmatprep.subr.bf16.mxu0 0
        %454 = vmatpush1.bf16.msra.mxu0 0
        %455 = vmatprep.subr.bf16.mxu0 0
        %456 = vmatpush1.bf16.msra.mxu0 0
        %457 = vmatprep.subr.bf16.mxu0 0
        %458 = vmatpush1.bf16.msra.mxu0 0
        %459 = vmatprep.subr.bf16.mxu0 0
        %460 = vmatpush1.bf16.msra.mxu0 0
        %461 = vmatprep.subr.bf16.mxu0 0
        %462 = vmatpush1.bf16.msra.mxu0 0
        %463 = vmatprep.subr.bf16.mxu0 0
        %464 = vmatpush1.bf16.msra.mxu0 0
        %465 = vmatprep.subr.bf16.mxu0 0
        %466 = vmatpush1.bf16.msra.mxu0 0
        %467 = vmatprep.subr.bf16.mxu0 0
        %468 = vmatpush1.bf16.msra.mxu0 0
        %469 = vmatprep.subr.bf16.mxu0 0
        %470 = vmatpush1.bf16.msra.mxu0 0
        %471 = vmatprep.subr.bf16.mxu0 0
        %472 = vmatpush1.bf16.msra.mxu0 0
        %473 = vmatprep.subr.bf16.mxu0 0
        %474 = vmatpush1.bf16.msra.mxu0 0
        %475 = vmatprep.subr.bf16.mxu0 0
        %476 = vmatpush1.bf16.msra.mxu0 0
        %477 = vmatprep.subr.bf16.mxu0 0
        %478 = vmatpush1.bf16.msra.mxu0 0
        %479 = vmatprep.subr.bf16.mxu0 0
        %480 = vmatpush1.bf16.msra.mxu0 0
        %481 = vmatprep.mubr.bf16.mxu0 0
        %482 = vmatmul.mubr.bf16.gmra.mrb[0].mxu0 %v321
        %v483 = vpop.f32.mrb[0].mxu0
        %v484 = vadd.f32 %v299, %v483
        %v485 = vpop.f32.mrb[0].mxu0
        %v486 = vpop.f32.mrb[0].mxu0
        %v487 = vadd.f32 %v304, %v486
        %v488 = vpop.f32.mrb[0].mxu0
        %489 = vmatprep.mubr.bf16.mxu0 0
        %490 = vmatmul.mubr.bf16.gmra.mrb[0].mxu0 %v324
        %v491 = vpop.f32.mrb[0].mxu0
        %v492 = vadd.f32 %v309, %v491
        %v493 = vpop.f32.mrb[0].mxu0
        %v494 = vpop.f32.mrb[0].mxu0
        %v495 = vpop.f32.mrb[0].mxu0
        %496 = vdwg.mxu0
        %v497 = vmax.f32 %v484, 0.0
        %v498 = vmax.f32 %v487, 0.0
        %v499 = vmax.f32 %v492, 0.0
        %v500 = vpack.c.bf16 %v498, %v497
        %v501 = vpack.c.bf16 %v499, %v499
        %v503 = vand.u32 %v501, %v398
        %505 = vmatprep.subr.bf16.mxu0 0
        %506 = vmatpush1.bf16.msra.mxu0 %v500
        %507 = vmatprep.subr.bf16.mxu0 0
        %508 = vmatpush1.bf16.msra.mxu0 %v503
        %509 = vmatprep.subr.bf16.mxu0 0
        %510 = vmatpush1.bf16.msra.mxu0 0
        %511 = vmatprep.subr.bf16.mxu0 0
        %512 = vmatpush1.bf16.msra.mxu0 0
        %513 = vmatprep.subr.bf16.mxu0 0
        %514 = vmatpush1.bf16.msra.mxu0 0
        %515 = vmatprep.subr.bf16.mxu0 0
        %516 = vmatpush1.bf16.msra.mxu0 0
        %517 = vmatprep.subr.bf16.mxu0 0
        %518 = vmatpush1.bf16.msra.mxu0 0
        %519 = vmatprep.subr.bf16.mxu0 0
        %520 = vmatpush1.bf16.msra.mxu0 0
        %521 = vmatprep.subr.bf16.mxu0 0
        %522 = vmatpush1.bf16.msra.mxu0 0
        %523 = vmatprep.subr.bf16.mxu0 0
        %524 = vmatpush1.bf16.msra.mxu0 0
        %525 = vmatprep.subr.bf16.mxu0 0
        %526 = vmatpush1.bf16.msra.mxu0 0
        %527 = vmatprep.subr.bf16.mxu0 0
        %528 = vmatpush1.bf16.msra.mxu0 0
        %529 = vmatprep.subr.bf16.mxu0 0
        %530 = vmatpush1.bf16.msra.mxu0 0
        %531 = vmatprep.subr.bf16.mxu0 0
        %532 = vmatpush1.bf16.msra.mxu0 0
        %533 = vmatprep.subr.bf16.mxu0 0
        %534 = vmatpush1.bf16.msra.mxu0 0
        %535 = vmatprep.subr.bf16.mxu0 0
        %536 = vmatpush1.bf16.msra.mxu0 0
        %537 = vmatprep.mubr.bf16.mxu0 0
        %538 = vmatmul.mubr.bf16.gmra.mrb[0].mxu0 %v393
        %v539 = vpop.f32.mrb[0].mxu0
        %v540 = vadd.f32 %v389, %v539
        %v541 = vpop.f32.mrb[0].mxu0
        %v542 = vpop.f32.mrb[0].mxu0
        %v543 = vpop.f32.mrb[0].mxu0
        %544 = vdwg.mxu0
        %s545 = scalar_lea.vmem %s282, 4 [#allocation3]
        %546 = vst [vmem:[%s545] sm:$0x7] %v540
        %s547 = sand.u32 %s150, 1
        %s548 = sand.u32 %s150, 1
        %s549 = smul.addr %s548, 8
        %s550 = scalar_lea.vmem [#allocation3], %s549
        // Predicated region
        $region82: #{autoencoder_forward.1} parent=76 // pred_check
          %p551 = pneg %p160
        $region83: #{autoencoder_forward.1} parent=76 // pred_check_branch
          %553 = sbr.rel (%p551) target = $region85
        $region84: #{autoencoder_forward.1} parent=76 // pred_region
          %s554 = smul.u32 2, %s20
          %s555 = smul.addr %s554, 2
          %s556 = sadd.s32 %s21, %s555
          %s557 = smul.addr %s556, 4
          %s558 = scalar_lea.vmem %s5, %s557
          // Predicated region
          $region86: #{autoencoder_forward.1} parent=84 // pred_check
            _
          $region87: #{autoencoder_forward.1} parent=84 // pred_check_branch
            %560 = sbr.rel (0) target = $region89
          $region88: #{autoencoder_forward.1} parent=84 // pred_region
            // Predicated region
            $region90: #{autoencoder_forward.1} parent=88 // pred_check
              _
            $region91: #{autoencoder_forward.1} parent=88 // pred_check_branch
              %562 = sbr.rel target = $region93
            $region92: #{autoencoder_forward.1} parent=88 // pred_region
              // Predicated region
              $region105: #{autoencoder_forward.1} parent=92 // pred_check
                _
              $region106: #{autoencoder_forward.1} parent=92 // pred_check_branch
                %579 = sbr.rel (0) target = $region108
              $region107: #{autoencoder_forward.1} parent=92 // pred_region
                loop: start=0, step=1, limit=1
                $region109: #{autoencoder_forward.1} parent=107 // loop_pre_header
                  _
                $region110: #{autoencoder_forward.1} parent=107 // loop_header
                  %s581 = sphi 0, %s585
                  %p582 = scmp.ge.s32.totalorder %s581, 1
                  %s586 = sphi %s550, %s550
                  %s587 = sphi %s558, %s558
                $region111: #{autoencoder_forward.1} parent=107 // loop_header_branch
                  %584 = sbr.rel (%p582) target = $region115
                $region112: #{autoencoder_forward.1} parent=107 // loop_body
                  _
                $region113: #{autoencoder_forward.1} parent=107 // loop_footer
                  %s585 = sadd.s32 1, %s581
                $region114: #{autoencoder_forward.1} parent=107 // loop_footer_branch
                  %580 = sbr.rel target = $region110
                $region115: #{autoencoder_forward.1} parent=107 // loop_exit
                  _
                loop: start=0, step=1, limit=1
                $region116: #{autoencoder_forward.1} parent=107 // loop_pre_header
                  _
                $region117: #{autoencoder_forward.1} parent=107 // loop_header
                  %s590 = sphi 0, %s594
                  %p591 = scmp.ge.s32.totalorder %s590, 1
                  %s595 = sphi %s550, %s550
                  %s596 = sphi %s558, %s558
                $region118: #{autoencoder_forward.1} parent=107 // loop_header_branch
                  %593 = sbr.rel (%p591) target = $region122
                $region119: #{autoencoder_forward.1} parent=107 // loop_body
                  %v597 = vld [vmem:[%s595] sm:$0xf]
                  %598 = vst [vmem:[%s596] sm:$0xf] %v597
                  %v599 = vld [vmem:[%s595 + $0x4] sm:$0xf]
                  %600 = vst [vmem:[%s596 + $0x8] sm:$0xf] %v599
                $region120: #{autoencoder_forward.1} parent=107 // loop_footer
                  %s594 = sadd.s32 1, %s590
                $region121: #{autoencoder_forward.1} parent=107 // loop_footer_branch
                  %589 = sbr.rel target = $region117
                $region122: #{autoencoder_forward.1} parent=107 // loop_exit
                  _
              $region108: #{autoencoder_forward.1} parent=92 // pred_fallthru
                _
            $region93: #{autoencoder_forward.1} parent=88 // pred_fallthru
              _
            // Predicated region
            $region94: #{autoencoder_forward.1} parent=88 // pred_check
              _
            $region95: #{autoencoder_forward.1} parent=88 // pred_check_branch
              %564 = sbr.rel (0) target = $region97
            $region96: #{autoencoder_forward.1} parent=88 // pred_region
              loop: start=0, step=1, limit=1
              $region98: #{autoencoder_forward.1} parent=96 // loop_pre_header
                _
              $region99: #{autoencoder_forward.1} parent=96 // loop_header
                %s567 = sphi 0, %s571
                %p568 = scmp.ge.s32.totalorder %s567, 1
                %s572 = sphi %s550, %s550
                %s573 = sphi %s558, %s558
              $region100: #{autoencoder_forward.1} parent=96 // loop_header_branch
                %570 = sbr.rel (%p568) target = $region104
              $region101: #{autoencoder_forward.1} parent=96 // loop_body
                %v574 = vld [vmem:[%s572] sm:$0xf]
                %575 = vst [vmem:[%s573] sm:$0xf] %v574
                %v576 = vld [vmem:[%s572 + $0x4] sm:$0xf]
                %577 = vst [vmem:[%s573 + $0x8] sm:$0xf] %v576
              $region102: #{autoencoder_forward.1} parent=96 // loop_footer
                %s571 = sadd.s32 1, %s567
              $region103: #{autoencoder_forward.1} parent=96 // loop_footer_branch
                %566 = sbr.rel target = $region99
              $region104: #{autoencoder_forward.1} parent=96 // loop_exit
                _
            $region97: #{autoencoder_forward.1} parent=88 // pred_fallthru
              _
          $region89: #{autoencoder_forward.1} parent=84 // pred_fallthru
            _
          %601 = vnop
        $region85: #{autoencoder_forward.1} parent=76 // pred_fallthru
          _
      $region77: #{autoencoder_forward.1} parent=5 // pred_fallthru
        _
      %p602 = scmp.le.s32.totalorder 2, %s11
      // Predicated region
      $region123: #{autoencoder_forward.1} parent=5 // pred_check
        %p603 = pneg %p602
      $region124: #{autoencoder_forward.1} parent=5 // pred_check_branch
        %605 = sbr.rel (%p603) target = $region126
      $region125: #{autoencoder_forward.1} parent=5 // pred_region
        %s606 = ssub.s32 %s11, 2
        // Predicated region
        $region127: #{autoencoder_forward.1} parent=125 // pred_check
          %p607 = pneg %p166
        $region128: #{autoencoder_forward.1} parent=125 // pred_check_branch
          %609 = sbr.rel (%p607) target = $region130
        $region129: #{autoencoder_forward.1} parent=125 // pred_region
          %s610 = sand.u32 %s151, 1
          %s611 = sand.u32 %s151, 1
          %s612 = smul.addr %s611, 8
          %s613 = scalar_lea.vmem [#allocation3], %s612
        $region130: #{autoencoder_forward.1} parent=125 // pred_fallthru
          _
      $region126: #{autoencoder_forward.1} parent=5 // pred_fallthru
        _
    $region6: #{autoencoder_forward.1} parent=1 // loop_footer
      %s15 = sadd.s32 1, %s11
    $region7: #{autoencoder_forward.1} parent=1 // loop_footer_branch
      %10 = sbr.rel target = $region3
    $region8: #{autoencoder_forward.1} parent=1 // loop_exit
      _

</llo_original>
